<compile_context>
chip_gen: v6e
topology: v6e:2x2x1
jax: 0.10.0
libtpu: 0.0.40
codegen_flags: <defaults>
</compile_context>

<pallas_src>
import functools

import jax
import jax.numpy as jnp
from jax.experimental import pallas as pl
from jax.experimental.pallas import tpu as pltpu

# Problem sizes implied by the module (spacy lg vectors are 300-dim).
N_STR = 8          # number of input strings (sequence length) in the demo
D_IN = 300         # input_dims (spacy vector size)
D_HID = 10         # layer1 out
D_OUT = 3          # layer2 out (classes)

# Lane-aligned padded feature sizes.
D_IN_PAD = 384     # 300 -> next multiple of 128
D_HID_PAD = 128    # 10  -> 128
D_OUT_PAD = 128    # 3   -> 128 (lanes 3..127 masked to -1e30 pre-softmax)
NEG_MASK = -1e30   # padded-class logit value (exp underflows to exactly 0)


def _round_up(x, m):
    return m * ((x + m - 1) // m)


def choose_tile_n(n):
    """Row tile adapted to N.

    Small N: round up to the bf16 sublane pack (16) so the demo doesn't burn a
    256-row tile of padding.  Large N: bigger tiles toward the measured HBM
    roofline plateau, while keeping >=2 grid steps so v7x's second TensorCore
    participates via the "parallel" row axis.
    """
    if n <= 256:
        return max(16, _round_up(n, 16))
    if n >= 2048:
        return 1024
    if n >= 1024:
        return 512
    return 256


def mlp_softmax_kernel(x_ref, w1_ref, b1_ref, w2_ref, b2m_ref, o_ref):
    """Fused Linear -> LeakyReLU -> Linear -> (mask) -> Softmax for one row tile.

    x/w1/w2 are bf16 (native MXU path); accumulation and the epilogue are f32.
    b2m carries b2 (lanes 0..2) and -1e30 for the 125 padded class lanes, so
    padded rows/lanes never contaminate the softmax.
    """
    # layer1: bf16 x bf16 -> f32 accumulation, then broadcast bias add.
    h = jnp.dot(x_ref[...], w1_ref[...],
                preferred_element_type=jnp.float32)          # [TILE_N, 128] f32
    h = h + b1_ref[...]

    # LeakyReLU (PyTorch default negative_slope 0.01): single VALU max.
    h = jnp.maximum(h, 0.01 * h)

    # layer2: bf16 x bf16 -> f32, then bias + padded-class mask in one vadd.
    logits = jnp.dot(h.astype(jnp.bfloat16), w2_ref[...],
                     preferred_element_type=jnp.float32)      # [TILE_N, 128] f32
    logits = logits + b2m_ref[...]

    # Softmax over the class axis (== torch Softmax(dim=3) on [1, 1, N, 3]).
    m = jnp.max(logits, axis=-1, keepdims=True)
    e = jnp.exp(logits - m)
    s = jnp.sum(e, axis=-1, keepdims=True)
    o_ref[...] = (e * pl.reciprocal(s, approx=True)).astype(o_ref.dtype)


def pack_params(w1, b1, w2, b2):
    """Pad weights/biases to lane-aligned slabs.

    w1: [D_IN, D_HID] ([in, out]), b1: [D_HID], w2: [D_HID, D_OUT], b2: [D_OUT]
    Returns:
      w1p bf16 [384, 128], b1p f32 [1, 128],
      w2p bf16 [128, 128], b2m f32 [1, 128] (b2 in lanes 0..2, -1e30 elsewhere)
    """
    w1p = jnp.zeros((D_IN_PAD, D_HID_PAD), jnp.float32).at[:D_IN, :D_HID].set(w1)
    b1p = jnp.zeros((1, D_HID_PAD), jnp.float32).at[0, :D_HID].set(b1)
    w2p = jnp.zeros((D_HID_PAD, D_OUT_PAD), jnp.float32).at[:D_HID, :D_OUT].set(w2)
    b2m = jnp.full((1, D_OUT_PAD), NEG_MASK, jnp.float32).at[0, :D_OUT].set(b2)
    return w1p.astype(jnp.bfloat16), b1p, w2p.astype(jnp.bfloat16), b2m


@functools.partial(jax.jit, static_argnames=("tile_n",))
def neural_net_forward_padded(x_embed, w1p, b1p, w2p, b2m, *, tile_n):
    """x_embed: [1, 1, N, 300] f32 (output of process_strings).

    Returns the padded bf16 [n_pad, 128] softmax slab.  The valid result is
    rows :N, lanes :3 — left unsliced so the consumer can fuse the slice into
    its first op instead of paying a separate HBM pass over the output stream.
    """
    n, d = x_embed.shape[2], x_embed.shape[3]
    n_pad = tile_n * pl.cdiv(n, tile_n)

    # Single fused reshape + pad + bf16 cast (one pass over x under jit); no
    # ones-lane trick, so no extra zeros/.at[].set materialization of x.
    xp = jnp.pad(x_embed.reshape(n, d),
                 ((0, n_pad - n), (0, D_IN_PAD - d))).astype(jnp.bfloat16)

    resident = dict(pipeline_mode=pl.Buffered(1))  # constant-index operands
    return pl.pallas_call(
        mlp_softmax_kernel,
        out_shape=jax.ShapeDtypeStruct((n_pad, D_OUT_PAD), jnp.bfloat16),
        grid=(n_pad // tile_n,),
        in_specs=[
            # x: one row tile per grid step.
            pl.BlockSpec((tile_n, D_IN_PAD), lambda i: (i, 0)),
            # Weights / biases: constant index maps -> DMA'd once, VMEM-resident.
            pl.BlockSpec((D_IN_PAD, D_HID_PAD), lambda i: (0, 0), **resident),
            pl.BlockSpec((1, D_HID_PAD), lambda i: (0, 0), **resident),
            pl.BlockSpec((D_HID_PAD, D_OUT_PAD), lambda i: (0, 0), **resident),
            pl.BlockSpec((1, D_OUT_PAD), lambda i: (0, 0), **resident),
        ],
        # Lane-dense 128-wide bf16 output tile -> unmasked stores at half the
        # previous (f32) store traffic.
        out_specs=pl.BlockSpec((tile_n, D_OUT_PAD), lambda i: (i, 0)),
        compiler_params=pltpu.CompilerParams(
            dimension_semantics=("parallel",)),
    )(xp, w1p, b1p, w2p, b2m)


def reference_forward(x_embed, w1, b1, w2, b2):
    """Pure-JAX f32 reference matching the torch module."""
    x2d = x_embed.reshape(x_embed.shape[2], x_embed.shape[3])
    h = x2d @ w1 + b1
    h = jnp.where(h >= 0.0, h, 0.01 * h)
    logits = h @ w2 + b2
    return jax.nn.softmax(logits, axis=-1)


if __name__ == "__main__":
    key = jax.random.PRNGKey(0)
    kx, kw1, kb1, kw2, kb2 = jax.random.split(key, 5)

    # Synthetic deterministic stand-in for spacy embeddings: [1, 1, N, 300].
    x = jax.random.normal(kx, (1, 1, N_STR, D_IN), dtype=jnp.float32)

    # nn.Linear-style init U(-1/sqrt(fan_in), 1/sqrt(fan_in)); weights stored
    # transposed ([in, out]) so the kernel computes x @ W + b.
    bound1 = 1.0 / (D_IN ** 0.5)
    w1 = jax.random.uniform(kw1, (D_IN, D_HID), minval=-bound1, maxval=bound1,
                            dtype=jnp.float32)
    b1 = jax.random.uniform(kb1, (D_HID,), minval=-bound1, maxval=bound1,
                            dtype=jnp.float32)
    bound2 = 1.0 / (D_HID ** 0.5)
    w2 = jax.random.uniform(kw2, (D_HID, D_OUT), minval=-bound2, maxval=bound2,
                            dtype=jnp.float32)
    b2 = jax.random.uniform(kb2, (D_OUT,), minval=-bound2, maxval=bound2,
                            dtype=jnp.float32)

    w1p, b1p, w2p, b2m = pack_params(w1, b1, w2, b2)
    tile_n = choose_tile_n(N_STR)

    out_pad = neural_net_forward_padded(x, w1p, b1p, w2p, b2m, tile_n=tile_n)
    jax.block_until_ready(out_pad)

    # Consumer-side slice of the valid region (== `x[0][0]` in torch).
    out = out_pad[:N_STR, :D_OUT].astype(jnp.float32)

    # Sanity: shape, rows sum to ~1, and match the pure-JAX f32 reference
    # (bf16 matmuls + bf16 output + approx reciprocal -> loose tolerance).
    ref = reference_forward(x, w1, b1, w2, b2)
    assert out.shape == (N_STR, D_OUT)
    assert bool(jnp.all(jnp.isfinite(out)))
    assert bool(jnp.allclose(jnp.sum(out, axis=-1), 1.0, atol=2e-2))
    assert bool(jnp.allclose(out, ref, atol=2e-2))

    print("KERNEL_OK")
</pallas_src>

<mosaic_0001>
module attributes {stable_mosaic.version = 11 : i64} {
  func.func @mlp_softmax_kernel(%arg0: i32, %arg1: memref<16x384xbf16, #tpu.memory_space<vmem>>, %arg2: memref<384x128xbf16, #tpu.memory_space<vmem>>, %arg3: memref<1x128xf32, #tpu.memory_space<vmem>>, %arg4: memref<128x128xbf16, #tpu.memory_space<vmem>>, %arg5: memref<1x128xf32, #tpu.memory_space<vmem>>, %arg6: memref<16x128xbf16, #tpu.memory_space<vmem>>) attributes {dimension_semantics = [#tpu.dimension_semantics<parallel>], iteration_bounds = array<i64: 1>, scalar_prefetch = 0 : i64, scratch_operands = 0 : i64, tpu.core_type = #tpu.core_type<tc>, window_params = [{transform_indices = @transform_0, window_bounds = array<i64: 16, 384>}, {pipeline_mode = #tpu.pipeline_mode<synchronous>, transform_indices = @transform_1, window_bounds = array<i64: 384, 128>}, {pipeline_mode = #tpu.pipeline_mode<synchronous>, transform_indices = @transform_2, window_bounds = array<i64: 1, 128>}, {pipeline_mode = #tpu.pipeline_mode<synchronous>, transform_indices = @transform_3, window_bounds = array<i64: 128, 128>}, {pipeline_mode = #tpu.pipeline_mode<synchronous>, transform_indices = @transform_4, window_bounds = array<i64: 1, 128>}, {transform_indices = @transform_5, window_bounds = array<i64: 16, 128>}]} {
    %c0 = arith.constant 0 : index
    %c0_0 = arith.constant 0 : index
    %0 = vector.load %arg1[%c0, %c0_0] : memref<16x384xbf16, #tpu.memory_space<vmem>>, vector<16x384xbf16>
    %c0_1 = arith.constant 0 : index
    %c0_2 = arith.constant 0 : index
    %1 = vector.load %arg2[%c0_1, %c0_2] : memref<384x128xbf16, #tpu.memory_space<vmem>>, vector<384x128xbf16>
    %cst = arith.constant dense<0.000000e+00> : vector<16x128xf32>
    %2 = tpu.matmul %0, %1, %cst {dimension_numbers = #tpu.dot_dimension_numbers<[1], [0], [0], [1], [0, 0, 1, 1], [], []>} : vector<16x384xbf16>, vector<384x128xbf16>, vector<16x128xf32> -> vector<16x128xf32>
    %c0_3 = arith.constant 0 : index
    %c0_4 = arith.constant 0 : index
    %3 = vector.load %arg3[%c0_3, %c0_4] : memref<1x128xf32, #tpu.memory_space<vmem>>, vector<1x128xf32>
    %4 = vector.broadcast %3 : vector<1x128xf32> to vector<16x128xf32>
    %5 = arith.addf %2, %4 : vector<16x128xf32>
    %cst_5 = arith.constant 0.00999999977 : f32
    %6 = vector.broadcast %cst_5 : f32 to vector<16x128xf32>
    %7 = arith.mulf %6, %5 : vector<16x128xf32>
    %8 = arith.maximumf %5, %7 : vector<16x128xf32>
    %9 = arith.truncf %8 : vector<16x128xf32> to vector<16x128xbf16>
    %c0_6 = arith.constant 0 : index
    %c0_7 = arith.constant 0 : index
    %10 = vector.load %arg4[%c0_6, %c0_7] : memref<128x128xbf16, #tpu.memory_space<vmem>>, vector<128x128xbf16>
    %cst_8 = arith.constant dense<0.000000e+00> : vector<16x128xf32>
    %11 = tpu.matmul %9, %10, %cst_8 {dimension_numbers = #tpu.dot_dimension_numbers<[1], [0], [0], [1], [0, 0, 1, 1], [], []>} : vector<16x128xbf16>, vector<128x128xbf16>, vector<16x128xf32> -> vector<16x128xf32>
    %c0_9 = arith.constant 0 : index
    %c0_10 = arith.constant 0 : index
    %12 = vector.load %arg5[%c0_9, %c0_10] : memref<1x128xf32, #tpu.memory_space<vmem>>, vector<1x128xf32>
    %13 = vector.broadcast %12 : vector<1x128xf32> to vector<16x128xf32>
    %14 = arith.addf %11, %13 : vector<16x128xf32>
    %cst_11 = arith.constant dense<0xFF800000> : vector<16xf32>
    %15 = vector.multi_reduction <maximumf>, %14, %cst_11 [1] : vector<16x128xf32> to vector<16xf32>
    %16 = vector.shape_cast %15 : vector<16xf32> to vector<16x1xf32>
    %17 = vector.broadcast %16 : vector<16x1xf32> to vector<16x128xf32>
    %18 = arith.subf %14, %17 : vector<16x128xf32>
    %19 = math.exp %18 : vector<16x128xf32>
    %cst_12 = arith.constant dense<0.000000e+00> : vector<16xf32>
    %20 = vector.multi_reduction <add>, %19, %cst_12 [1] : vector<16x128xf32> to vector<16xf32>
    %21 = vector.shape_cast %20 : vector<16xf32> to vector<16x1xf32>
    %22 = tpu.reciprocal %21 {approx = true} : vector<16x1xf32> -> vector<16x1xf32>
    %23 = vector.broadcast %22 : vector<16x1xf32> to vector<16x128xf32>
    %24 = arith.mulf %19, %23 : vector<16x128xf32>
    %25 = arith.truncf %24 : vector<16x128xf32> to vector<16x128xbf16>
    %c0_13 = arith.constant 0 : index
    %c0_14 = arith.constant 0 : index
    %26 = vector.load %arg6[%c0_13, %c0_14] : memref<16x128xbf16, #tpu.memory_space<vmem>>, vector<16x128xbf16>
    tpu.vector_store %arg6[%c0_13, %c0_14], %25 {strides = array<i32>} : memref<16x128xbf16, #tpu.memory_space<vmem>>, vector<16x128xbf16>,
    return
  }
  func.func @transform_0(%arg0: i32) -> (i32, i32) {
    %c0_i32 = arith.constant 0 : i32
    %c0_i32_0 = arith.constant 0 : i32
    return %arg0, %c0_i32 : i32, i32
  }
  func.func @transform_1(%arg0: i32) -> (i32, i32) {
    %c0_i32 = arith.constant 0 : i32
    %c0_i32_0 = arith.constant 0 : i32
    %c0_i32_1 = arith.constant 0 : i32
    return %c0_i32, %c0_i32_0 : i32, i32
  }
  func.func @transform_2(%arg0: i32) -> (i32, i32) {
    %c0_i32 = arith.constant 0 : i32
    %c0_i32_0 = arith.constant 0 : i32
    %c0_i32_1 = arith.constant 0 : i32
    return %c0_i32, %c0_i32_0 : i32, i32
  }
  func.func @transform_3(%arg0: i32) -> (i32, i32) {
    %c0_i32 = arith.constant 0 : i32
    %c0_i32_0 = arith.constant 0 : i32
    %c0_i32_1 = arith.constant 0 : i32
    return %c0_i32, %c0_i32_0 : i32, i32
  }
  func.func @transform_4(%arg0: i32) -> (i32, i32) {
    %c0_i32 = arith.constant 0 : i32
    %c0_i32_0 = arith.constant 0 : i32
    %c0_i32_1 = arith.constant 0 : i32
    return %c0_i32, %c0_i32_0 : i32, i32
  }
  func.func @transform_5(%arg0: i32) -> (i32, i32) {
    %c0_i32 = arith.constant 0 : i32
    %c0_i32_0 = arith.constant 0 : i32
    return %arg0, %c0_i32 : i32, i32
  }
}

</mosaic_0001>

<llo_original>
// kernel: neural_net_forward_padded.1
$region0: #{neural_net_forward_padded.1}
  #allocation0 [shape = 'u32[]', space=smem, size = 0x4, offset = 0x4, fixed_abs, tag = 'smem constant byte address 0x4 - core index']
  #allocation1 [shape = 'u32[144,128]{1,0:T(1,128)}', space=vmem, size = 0x12000, scoped, tag = 'internal scratch']
  %s0 = inlined_call_operand.vmem [shape: bf16[16,384], index: 0, kind: input, shape index: {}]
  %s1 = inlined_call_operand.hbm [shape: bf16[384,128], index: 1, kind: input, shape index: {}]
  %s2 = inlined_call_operand.vmem [shape: f32[1,128], index: 2, kind: input, shape index: {}]
  %s3 = inlined_call_operand.vmem [shape: bf16[128,128], index: 3, kind: input, shape index: {}]
  %s4 = inlined_call_operand.vmem [shape: f32[1,128], index: 4, kind: input, shape index: {}]
  %s5 = inlined_call_operand.hbm [shape: bf16[16,128], index: 5, kind: output, shape index: {}]
  %s6 = sld [smem:[#allocation0]]
  $region34: #{neural_net_forward_padded.1} parent=0
    _
  %s8 = ssub.s32 1, %s6
  %s9 = scalar_select 0, %s8, %s6
  $region1: #{neural_net_forward_padded.1} parent=0
    #allocation2 [shape = 'u8[98304]{0}', space=vmem, size = 0x18000, scoped, tag = 'input window, operand 1, single buffered']
    #allocation3 [shape = 's32[1]{0}', space=sflag, size = 0x4, scoped, tag = 'scoped memory for neural_net_forward_padded.1']
    #allocation4 [shape = 's32[1]{0}', space=sflag, size = 0x4, scoped, tag = 'scoped memory for neural_net_forward_padded.1']
    #allocation5 [shape = 'u8[4096]{0}', space=vmem, size = 0x1000, scoped, tag = 'output window, operand 0, single buffered']
    %10 = vsyncpa [#allocation3], 0
    %11 = vsyncpa [#allocation4], 0
    // Predicated region
    $region2: #{neural_net_forward_padded.1} parent=1 // pred_check
      _
    $region3: #{neural_net_forward_padded.1} parent=1 // pred_check_branch
      %13 = sbr.rel (0) target = $region5
    $region4: #{neural_net_forward_padded.1} parent=1 // pred_region
      _
    $region5: #{neural_net_forward_padded.1} parent=1 // pred_fallthru
      _
    // Predicated region
    $region6: #{neural_net_forward_padded.1} parent=1 // pred_check
      _
    $region7: #{neural_net_forward_padded.1} parent=1 // pred_check_branch
      %15 = sbr.rel (0) target = $region9
    $region8: #{neural_net_forward_padded.1} parent=1 // pred_region
      %s17 = ssub.s32 3072, 3072
      %18 = vsyncadd [#allocation3], %s17
      %s19 = sshll.u32 [#allocation2], 4
      %s20 = int_to_ptr.vmem [resolvable:$true] %s19
      %25 = dma.hbm_to_vmem [thread:$0]  %s1, 3072, %s20, [#allocation3], 64, 64, 4
    $region9: #{neural_net_forward_padded.1} parent=1 // pred_fallthru
      _
    // Predicated region
    $region10: #{neural_net_forward_padded.1} parent=1 // pred_check
      _
    $region11: #{neural_net_forward_padded.1} parent=1 // pred_check_branch
      %27 = sbr.rel (0) target = $region13
    $region12: #{neural_net_forward_padded.1} parent=1 // pred_region
      _
    $region13: #{neural_net_forward_padded.1} parent=1 // pred_fallthru
      _
    // Predicated region
    $region14: #{neural_net_forward_padded.1} parent=1 // pred_check
      _
    $region15: #{neural_net_forward_padded.1} parent=1 // pred_check_branch
      %29 = sbr.rel (0) target = $region17
    $region16: #{neural_net_forward_padded.1} parent=1 // pred_region
      _
    $region17: #{neural_net_forward_padded.1} parent=1 // pred_fallthru
      _
    // Predicated region
    $region18: #{neural_net_forward_padded.1} parent=1 // pred_check
      _
    $region19: #{neural_net_forward_padded.1} parent=1 // pred_check_branch
      %31 = sbr.rel (0) target = $region21
    $region20: #{neural_net_forward_padded.1} parent=1 // pred_region
      _
    $region21: #{neural_net_forward_padded.1} parent=1 // pred_fallthru
      _
    // Predicated region
    $region22: #{neural_net_forward_padded.1} parent=1 // pred_check
      _
    $region23: #{neural_net_forward_padded.1} parent=1 // pred_check_branch
      %33 = sbr.rel (0) target = $region25
    $region24: #{neural_net_forward_padded.1} parent=1 // pred_region
      %34 = dma.done [#allocation3], 3072
    $region25: #{neural_net_forward_padded.1} parent=1 // pred_fallthru
      _
    %v36 = vld [vmem:[%s0] sm:$0xff]
    %v37 = vld [vmem:[%s0 + $0x8] sm:$0xf]
    %v38 = vld [vmem:[%s0 + $0xc] sm:$0xff]
    %v39 = vld [vmem:[%s0 + $0x14] sm:$0xf]
    %v40 = vld [vmem:[#allocation2] sm:$0xf]
    %v41 = vld [vmem:[#allocation2 + $0x4] sm:$0xf]
    %v42 = vld [vmem:[#allocation2 + $0x8] sm:$0xf]
    %v43 = vld [vmem:[#allocation2 + $0xc] sm:$0xf]
    %v44 = vld [vmem:[#allocation2 + $0x10] sm:$0xf]
    %v45 = vld [vmem:[#allocation2 + $0x14] sm:$0xf]
    %v46 = vld [vmem:[#allocation2 + $0x18] sm:$0xf]
    %v47 = vld [vmem:[#allocation2 + $0x1c] sm:$0xf]
    %v48 = vld [vmem:[#allocation2 + $0x20] sm:$0xf]
    %v49 = vld [vmem:[#allocation2 + $0x24] sm:$0xf]
    %v50 = vld [vmem:[#allocation2 + $0x28] sm:$0xf]
    %v51 = vld [vmem:[#allocation2 + $0x2c] sm:$0xf]
    %v52 = vld [vmem:[#allocation2 + $0x30] sm:$0xf]
    %v53 = vld [vmem:[#allocation2 + $0x34] sm:$0xf]
    %v54 = vld [vmem:[#allocation2 + $0x38] sm:$0xf]
    %v55 = vld [vmem:[#allocation2 + $0x3c] sm:$0xf]
    %v56 = vld [vmem:[#allocation2 + $0x40] sm:$0xf]
    %v57 = vld [vmem:[#allocation2 + $0x44] sm:$0xf]
    %v58 = vld [vmem:[#allocation2 + $0x48] sm:$0xf]
    %v59 = vld [vmem:[#allocation2 + $0x4c] sm:$0xf]
    %v60 = vld [vmem:[#allocation2 + $0x50] sm:$0xf]
    %v61 = vld [vmem:[#allocation2 + $0x54] sm:$0xf]
    %v62 = vld [vmem:[#allocation2 + $0x58] sm:$0xf]
    %v63 = vld [vmem:[#allocation2 + $0x5c] sm:$0xf]
    %v64 = vld [vmem:[#allocation2 + $0x60] sm:$0xf]
    %v65 = vld [vmem:[#allocation2 + $0x64] sm:$0xf]
    %v66 = vld [vmem:[#allocation2 + $0x68] sm:$0xf]
    %v67 = vld [vmem:[#allocation2 + $0x6c] sm:$0xf]
    %v68 = vld [vmem:[#allocation2 + $0x70] sm:$0xf]
    %v69 = vld [vmem:[#allocation2 + $0x74] sm:$0xf]
    %v70 = vld [vmem:[#allocation2 + $0x78] sm:$0xf]
    %v71 = vld [vmem:[#allocation2 + $0x7c] sm:$0xf]
    %v72 = vld [vmem:[#allocation2 + $0x80] sm:$0xf]
    %v73 = vld [vmem:[#allocation2 + $0x84] sm:$0xf]
    %v74 = vld [vmem:[#allocation2 + $0x88] sm:$0xf]
    %v75 = vld [vmem:[#allocation2 + $0x8c] sm:$0xf]
    %v76 = vld [vmem:[#allocation2 + $0x90] sm:$0xf]
    %v77 = vld [vmem:[#allocation2 + $0x94] sm:$0xf]
    %v78 = vld [vmem:[#allocation2 + $0x98] sm:$0xf]
    %v79 = vld [vmem:[#allocation2 + $0x9c] sm:$0xf]
    %v80 = vld [vmem:[#allocation2 + $0xa0] sm:$0xf]
    %v81 = vld [vmem:[#allocation2 + $0xa4] sm:$0xf]
    %v82 = vld [vmem:[#allocation2 + $0xa8] sm:$0xf]
    %v83 = vld [vmem:[#allocation2 + $0xac] sm:$0xf]
    %v84 = vld [vmem:[#allocation2 + $0xb0] sm:$0xf]
    %v85 = vld [vmem:[#allocation2 + $0xb4] sm:$0xf]
    %v86 = vld [vmem:[#allocation2 + $0xb8] sm:$0xf]
    %v87 = vld [vmem:[#allocation2 + $0xbc] sm:$0xf]
    %v88 = vld [vmem:[%s2] sm:$0x1]
    %v90 = vlaneseq
    %v91 = vshrl.u32 %v90, 7
    %v92 = vsub.s32 0, %v91
    %v93 = vrot.slane %v88, %v92
    %v99 = vunpack.c.l.b16 %v36
    %v100 = vunpack.c.h.b16 %v36
    %v101 = vunpack.c.l.b16 %v37
    %v102 = vunpack.c.l.b16 %v38
    %v103 = vunpack.c.h.b16 %v38
    %v104 = vunpack.c.l.b16 %v39
    %v105 = vpack.c.b16 %v102, %v99
    %v106 = vpack.c.b16 %v103, %v100
    %v107 = vpack.c.b16 %v104, %v101
    %v159 = vunpack.c.l.b16 %v40
    %v160 = vunpack.c.l.b16 %v41
    %v161 = vunpack.c.l.b16 %v42
    %v162 = vunpack.c.l.b16 %v43
    %v163 = vunpack.c.l.b16 %v44
    %v164 = vunpack.c.l.b16 %v45
    %v165 = vunpack.c.l.b16 %v46
    %v166 = vunpack.c.l.b16 %v47
    %v167 = vunpack.c.l.b16 %v48
    %v168 = vunpack.c.l.b16 %v49
    %v169 = vunpack.c.l.b16 %v50
    %v170 = vunpack.c.l.b16 %v51
    %v171 = vunpack.c.l.b16 %v52
    %v172 = vunpack.c.l.b16 %v53
    %v173 = vunpack.c.l.b16 %v54
    %v174 = vunpack.c.l.b16 %v55
    %v175 = vunpack.c.l.b16 %v56
    %v176 = vunpack.c.l.b16 %v57
    %v177 = vunpack.c.l.b16 %v58
    %v178 = vunpack.c.l.b16 %v59
    %v179 = vunpack.c.l.b16 %v60
    %v180 = vunpack.c.l.b16 %v61
    %v181 = vunpack.c.l.b16 %v62
    %v182 = vunpack.c.l.b16 %v63
    %v183 = vunpack.c.l.b16 %v64
    %v184 = vunpack.c.l.b16 %v65
    %v185 = vunpack.c.l.b16 %v66
    %v186 = vunpack.c.l.b16 %v67
    %v187 = vunpack.c.l.b16 %v68
    %v188 = vunpack.c.l.b16 %v69
    %v189 = vunpack.c.l.b16 %v70
    %v190 = vunpack.c.l.b16 %v71
    %v191 = vunpack.c.l.b16 %v72
    %v192 = vunpack.c.l.b16 %v73
    %v193 = vunpack.c.l.b16 %v74
    %v194 = vunpack.c.l.b16 %v75
    %v195 = vunpack.c.l.b16 %v76
    %v196 = vunpack.c.l.b16 %v77
    %v197 = vunpack.c.l.b16 %v78
    %v198 = vunpack.c.l.b16 %v79
    %v199 = vunpack.c.l.b16 %v80
    %v200 = vunpack.c.l.b16 %v81
    %v201 = vunpack.c.l.b16 %v82
    %v202 = vunpack.c.l.b16 %v83
    %v203 = vunpack.c.l.b16 %v84
    %v204 = vunpack.c.l.b16 %v85
    %v205 = vunpack.c.l.b16 %v86
    %v206 = vunpack.c.l.b16 %v87
    %v207 = vpack.c.b16 %v160, %v159
    %v208 = vpack.c.b16 %v162, %v161
    %v209 = vpack.c.b16 %v164, %v163
    %v210 = vpack.c.b16 %v166, %v165
    %v211 = vpack.c.b16 %v168, %v167
    %v212 = vpack.c.b16 %v170, %v169
    %v213 = vpack.c.b16 %v172, %v171
    %v214 = vpack.c.b16 %v174, %v173
    %v215 = vpack.c.b16 %v176, %v175
    %v216 = vpack.c.b16 %v178, %v177
    %v217 = vpack.c.b16 %v180, %v179
    %v218 = vpack.c.b16 %v182, %v181
    %v219 = vpack.c.b16 %v184, %v183
    %v220 = vpack.c.b16 %v186, %v185
    %v221 = vpack.c.b16 %v188, %v187
    %v222 = vpack.c.b16 %v190, %v189
    %v223 = vpack.c.b16 %v192, %v191
    %v224 = vpack.c.b16 %v194, %v193
    %v225 = vpack.c.b16 %v196, %v195
    %v226 = vpack.c.b16 %v198, %v197
    %v227 = vpack.c.b16 %v200, %v199
    %v228 = vpack.c.b16 %v202, %v201
    %v229 = vpack.c.b16 %v204, %v203
    %v230 = vpack.c.b16 %v206, %v205
    %255 = vmatprep.subr.bf16.mxu0 0
    %256 = vmatpush1.bf16.msra.mxu0 %v214
    %257 = vmatprep.subr.bf16.mxu0 0
    %258 = vmatpush1.bf16.msra.mxu0 %v213
    %259 = vmatprep.subr.bf16.mxu0 0
    %260 = vmatpush1.bf16.msra.mxu0 %v212
    %261 = vmatprep.subr.bf16.mxu0 0
    %262 = vmatpush1.bf16.msra.mxu0 %v211
    %263 = vmatprep.subr.bf16.mxu0 0
    %264 = vmatpush1.bf16.msra.mxu0 %v210
    %265 = vmatprep.subr.bf16.mxu0 0
    %266 = vmatpush1.bf16.msra.mxu0 %v209
    %267 = vmatprep.subr.bf16.mxu0 0
    %268 = vmatpush1.bf16.msra.mxu0 %v208
    %269 = vmatprep.subr.bf16.mxu0 0
    %270 = vmatpush1.bf16.msra.mxu0 %v207
    %271 = vmatprep.subr.bf16.mxu0 0
    %272 = vmatpush2.bf16.msra.mxu0 %v222
    %273 = vmatprep.subr.bf16.mxu0 0
    %274 = vmatpush2.bf16.msra.mxu0 %v221
    %275 = vmatprep.subr.bf16.mxu0 0
    %276 = vmatpush2.bf16.msra.mxu0 %v220
    %277 = vmatprep.subr.bf16.mxu0 0
    %278 = vmatpush2.bf16.msra.mxu0 %v219
    %279 = vmatprep.subr.bf16.mxu0 0
    %280 = vmatpush2.bf16.msra.mxu0 %v218
    %281 = vmatprep.subr.bf16.mxu0 0
    %282 = vmatpush2.bf16.msra.mxu0 %v217
    %283 = vmatprep.subr.bf16.mxu0 0
    %284 = vmatpush2.bf16.msra.mxu0 %v216
    %285 = vmatprep.subr.bf16.mxu0 0
    %286 = vmatpush2.bf16.msra.mxu0 %v215
    %287 = vmatprep.mubr.bf16.mxu0 %v106
    %288 = vmatmul.mubr.bf16.gmra.mxu0 %v105
    %v289 = vpop.f32.mrf.mxu0
    %v290 = vadd.f32 %v93, %v289
    %v291 = vpop.f32.mrf.mxu0
    %v292 = vpop.f32.mrf.mxu0
    %v293 = vadd.f32 %v93, %v292
    %v294 = vpop.f32.mrf.mxu0
    %295 = vdwg.mxu0
    %296 = vmatprep.subr.bf16.mxu0 0
    %297 = vmatpush1.bf16.msra.mxu0 %v230
    %298 = vmatprep.subr.bf16.mxu0 0
    %299 = vmatpush1.bf16.msra.mxu0 %v229
    %300 = vmatprep.subr.bf16.mxu0 0
    %301 = vmatpush1.bf16.msra.mxu0 %v228
    %302 = vmatprep.subr.bf16.mxu0 0
    %303 = vmatpush1.bf16.msra.mxu0 %v227
    %304 = vmatprep.subr.bf16.mxu0 0
    %305 = vmatpush1.bf16.msra.mxu0 %v226
    %306 = vmatprep.subr.bf16.mxu0 0
    %307 = vmatpush1.bf16.msra.mxu0 %v225
    %308 = vmatprep.subr.bf16.mxu0 0
    %309 = vmatpush1.bf16.msra.mxu0 %v224
    %310 = vmatprep.subr.bf16.mxu0 0
    %311 = vmatpush1.bf16.msra.mxu0 %v223
    %312 = vmatprep.subr.bf16.mxu0 0
    %313 = vmatpush2.bf16.msra.mxu0 0
    %314 = vmatprep.subr.bf16.mxu0 0
    %315 = vmatpush2.bf16.msra.mxu0 0
    %316 = vmatprep.subr.bf16.mxu0 0
    %317 = vmatpush2.bf16.msra.mxu0 0
    %318 = vmatprep.subr.bf16.mxu0 0
    %319 = vmatpush2.bf16.msra.mxu0 0
    %320 = vmatprep.subr.bf16.mxu0 0
    %321 = vmatpush2.bf16.msra.mxu0 0
    %322 = vmatprep.subr.bf16.mxu0 0
    %323 = vmatpush2.bf16.msra.mxu0 0
    %324 = vmatprep.subr.bf16.mxu0 0
    %325 = vmatpush2.bf16.msra.mxu0 0
    %326 = vmatprep.subr.bf16.mxu0 0
    %327 = vmatpush2.bf16.msra.mxu0 0
    %328 = vmatprep.mubr.bf16.mxu0 0
    %329 = vmatmul.mubr.bf16.gmra.mxu0 %v107
    %v330 = vpop.f32.mrf.mxu0
    %v331 = vadd.f32 %v290, %v330
    %v332 = vpop.f32.mrf.mxu0
    %v333 = vpop.f32.mrf.mxu0
    %v334 = vadd.f32 %v293, %v333
    %v335 = vpop.f32.mrf.mxu0
    %336 = vdwg.mxu0
    %v337 = vmul.f32 %v331, 0.01
    %v338 = vmul.f32 %v334, 0.01
    %v339 = vmax.f32 %v331, %v337
    %v340 = vmax.f32 %v334, %v338
    %v341 = vpack.c.bf16 %v340, %v339
    %v342 = vld [vmem:[%s3] sm:$0xf]
    %v343 = vld [vmem:[%s3 + $0x4] sm:$0xf]
    %v344 = vld [vmem:[%s3 + $0x8] sm:$0xf]
    %v345 = vld [vmem:[%s3 + $0xc] sm:$0xf]
    %v346 = vld [vmem:[%s3 + $0x10] sm:$0xf]
    %v347 = vld [vmem:[%s3 + $0x14] sm:$0xf]
    %v348 = vld [vmem:[%s3 + $0x18] sm:$0xf]
    %v349 = vld [vmem:[%s3 + $0x1c] sm:$0xf]
    %v350 = vld [vmem:[%s3 + $0x20] sm:$0xf]
    %v351 = vld [vmem:[%s3 + $0x24] sm:$0xf]
    %v352 = vld [vmem:[%s3 + $0x28] sm:$0xf]
    %v353 = vld [vmem:[%s3 + $0x2c] sm:$0xf]
    %v354 = vld [vmem:[%s3 + $0x30] sm:$0xf]
    %v355 = vld [vmem:[%s3 + $0x34] sm:$0xf]
    %v356 = vld [vmem:[%s3 + $0x38] sm:$0xf]
    %v357 = vld [vmem:[%s3 + $0x3c] sm:$0xf]
    %v358 = vld [vmem:[%s4] sm:$0x1]
    %v360 = vlaneseq
    %v361 = vshrl.u32 %v360, 7
    %v362 = vsub.s32 0, %v361
    %v363 = vrot.slane %v358, %v362
    %v381 = vunpack.c.l.b16 %v342
    %v382 = vunpack.c.l.b16 %v343
    %v383 = vunpack.c.l.b16 %v344
    %v384 = vunpack.c.l.b16 %v345
    %v385 = vunpack.c.l.b16 %v346
    %v386 = vunpack.c.l.b16 %v347
    %v387 = vunpack.c.l.b16 %v348
    %v388 = vunpack.c.l.b16 %v349
    %v389 = vunpack.c.l.b16 %v350
    %v390 = vunpack.c.l.b16 %v351
    %v391 = vunpack.c.l.b16 %v352
    %v392 = vunpack.c.l.b16 %v353
    %v393 = vunpack.c.l.b16 %v354
    %v394 = vunpack.c.l.b16 %v355
    %v395 = vunpack.c.l.b16 %v356
    %v396 = vunpack.c.l.b16 %v357
    %v397 = vpack.c.b16 %v382, %v381
    %v398 = vpack.c.b16 %v384, %v383
    %v399 = vpack.c.b16 %v386, %v385
    %v400 = vpack.c.b16 %v388, %v387
    %v401 = vpack.c.b16 %v390, %v389
    %v402 = vpack.c.b16 %v392, %v391
    %v403 = vpack.c.b16 %v394, %v393
    %v404 = vpack.c.b16 %v396, %v395
    %413 = vmatprep.subr.bf16.mxu0 0
    %414 = vmatpush1.bf16.msra.mxu0 %v404
    %415 = vmatprep.subr.bf16.mxu0 0
    %416 = vmatpush1.bf16.msra.mxu0 %v403
    %417 = vmatprep.subr.bf16.mxu0 0
    %418 = vmatpush1.bf16.msra.mxu0 %v402
    %419 = vmatprep.subr.bf16.mxu0 0
    %420 = vmatpush1.bf16.msra.mxu0 %v401
    %421 = vmatprep.subr.bf16.mxu0 0
    %422 = vmatpush1.bf16.msra.mxu0 %v400
    %423 = vmatprep.subr.bf16.mxu0 0
    %424 = vmatpush1.bf16.msra.mxu0 %v399
    %425 = vmatprep.subr.bf16.mxu0 0
    %426 = vmatpush1.bf16.msra.mxu0 %v398
    %427 = vmatprep.subr.bf16.mxu0 0
    %428 = vmatpush1.bf16.msra.mxu0 %v397
    %429 = vmatprep.subr.bf16.mxu0 0
    %430 = vmatpush2.bf16.msra.mxu0 0
    %431 = vmatprep.subr.bf16.mxu0 0
    %432 = vmatpush2.bf16.msra.mxu0 0
    %433 = vmatprep.subr.bf16.mxu0 0
    %434 = vmatpush2.bf16.msra.mxu0 0
    %435 = vmatprep.subr.bf16.mxu0 0
    %436 = vmatpush2.bf16.msra.mxu0 0
    %437 = vmatprep.subr.bf16.mxu0 0
    %438 = vmatpush2.bf16.msra.mxu0 0
    %439 = vmatprep.subr.bf16.mxu0 0
    %440 = vmatpush2.bf16.msra.mxu0 0
    %441 = vmatprep.subr.bf16.mxu0 0
    %442 = vmatpush2.bf16.msra.mxu0 0
    %443 = vmatprep.subr.bf16.mxu0 0
    %444 = vmatpush2.bf16.msra.mxu0 0
    %445 = vmatprep.mubr.bf16.mxu0 0
    %446 = vmatmul.mubr.bf16.gmra.mxu0 %v341
    %v447 = vpop.f32.mrf.mxu0
    %v448 = vadd.f32 %v363, %v447
    %v449 = vpop.f32.mrf.mxu0
    %v450 = vpop.f32.mrf.mxu0
    %v451 = vadd.f32 %v363, %v450
    %v452 = vpop.f32.mrf.mxu0
    %453 = vdwg.mxu0
    %454 = vmax.xlane.f32.xlu0 %v448
    %v455 = vpop.xlane.xlu0 %454
    %456 = vmax.xlane.f32.xlu0 %v451
    %v457 = vpop.xlane.xlu0 %456
    %v458 = vsub.f32 %v448, %v455
    %v459 = vsub.f32 %v451, %v457
    %v460 = vmul.f32 %v458, 1.442695
    %v461 = vpow.pop %v460
    %v462 = vmul.f32 %v459, 1.442695
    %v463 = vpow.pop %v462
    %464 = vadd.xlane.f32.xlu0 %v461
    %v465 = vpop.xlane.xlu0 %464
    %466 = vadd.xlane.f32.xlu0 %v463
    %v467 = vpop.xlane.xlu0 %466
    %v468 = vrcp.pop %v465
    %v469 = vrcp.pop %v467
    %v470 = vmul.f32 %v461, %v468
    %v471 = vmul.f32 %v463, %v469
    %v472 = vpack.c.bf16 %v471, %v470
    %v474 = vunpack.c.l.b16 %v472
    %v475 = vunpack.c.h.b16 %v472
    %v476 = vpack.c.b16 %v474, %v474
    %v477 = vpack.c.b16 %v475, %v475
    %480 = vst [vmem:[#allocation5] sm:$0xf] %v476
    %481 = vst [vmem:[#allocation5 + $0x4] sm:$0xf] %v477
    // Predicated region
    $region26: #{neural_net_forward_padded.1} parent=1 // pred_check
      _
    $region27: #{neural_net_forward_padded.1} parent=1 // pred_check_branch
      %483 = sbr.rel (0) target = $region29
    $region28: #{neural_net_forward_padded.1} parent=1 // pred_region
      %s485 = ssub.s32 128, 128
      %486 = vsyncadd [#allocation4], %s485
      %s487 = sshll.u32 [#allocation5], 4
      %s488 = int_to_ptr.vmem [resolvable:$true] %s487
      %493 = dma.vmem_to_hbm [thread:$0]  %s488, 128, %s5, [#allocation4], 64, 64, 4
    $region29: #{neural_net_forward_padded.1} parent=1 // pred_fallthru
      _
    // Predicated region
    $region30: #{neural_net_forward_padded.1} parent=1 // pred_check
      _
    $region31: #{neural_net_forward_padded.1} parent=1 // pred_check_branch
      %495 = sbr.rel (0) target = $region33
    $region32: #{neural_net_forward_padded.1} parent=1 // pred_region
      %496 = dma.done [#allocation4], 128
    $region33: #{neural_net_forward_padded.1} parent=1 // pred_fallthru
      _
    %497 = vsyncpa [#allocation3], 1
    %498 = vsyncpa [#allocation4], 1

</llo_original>
